<compile_context>
chip_gen: v6e
topology: v6e:2x2x1
jax: 0.10.0
libtpu: 0.0.40
codegen_flags: <defaults>
</compile_context>

<pallas_src>
import functools

import jax
import jax.numpy as jnp
from jax.experimental import pallas as pl
from jax.experimental.pallas import tpu as pltpu

STATE_DIM = 3      # Pendulum-v1 observation dim
ACTION_DIM = 1     # Pendulum-v1 action dim
HIDDEN = 128
BATCH = 8          # small demo batch; real rollouts should use B >= 256
OUT_COLS = 2 * ACTION_DIM   # packed output columns: [mean | std]


def _round_up(x, m):
    return ((x + m - 1) // m) * m


def _policy_kernel(x_ref,
                   w1_ref, b1_ref,
                   w2_ref, b2_ref,
                   w3_ref, b3_ref,
                   wh_ref, bh_ref,
                   out_ref):
    """One batch tile: VPU fc1 + two bf16 MXU layers + VPU/XLU heads + exp."""
    x = x_ref[...]                       # (TB, STATE_DIM) f32
    w1 = w1_ref[...]                     # (STATE_DIM, HIDDEN) f32

    # ---- fc1 on the VPU: K=3 matmul as 3 broadcast multiply-adds -----------
    h1 = b1_ref[...]                     # (1, HIDDEN) -> broadcasts to (TB, HIDDEN)
    for k in range(STATE_DIM):           # unrolled at trace time
        h1 = h1 + x[:, k:k + 1] * w1[k:k + 1, :]
    h1 = jnp.maximum(h1, 0.0)

    # ---- fc2 / fc3 on the MXU: bf16 operands, f32 accumulation -------------
    h2 = jnp.dot(h1.astype(jnp.bfloat16), w2_ref[...],
                 preferred_element_type=jnp.float32) + b2_ref[...]
    h2 = jnp.maximum(h2, 0.0)

    h3 = jnp.dot(h2.astype(jnp.bfloat16), w3_ref[...],
                 preferred_element_type=jnp.float32) + b3_ref[...]
    h3 = jnp.maximum(h3, 0.0)

    # ---- heads: VPU broadcast-mul + XLU lane reduction (no MXU, no padding)
    wh = wh_ref[...]                     # (2, HIDDEN) f32: row 0 = mean, row 1 = log_std
    bh = bh_ref[...]                     # (1, 2) f32
    mean = jnp.sum(h3 * wh[0:1, :], axis=-1, keepdims=True) + bh[:, 0:1]
    log_std = jnp.sum(h3 * wh[1:2, :], axis=-1, keepdims=True) + bh[:, 1:2]

    out_ref[:, 0:ACTION_DIM] = mean
    out_ref[:, ACTION_DIM:OUT_COLS] = jnp.exp(log_std)


@functools.partial(jax.jit, static_argnames=("tile_b",))
def policy_forward(x, params, tile_b=256):
    """x: (B, STATE_DIM) f32 -> (mean, std), each (B, ACTION_DIM) f32."""
    b = x.shape[0]
    tb = min(tile_b, _round_up(b, 8))          # batch tile, multiple of 8 (f32 sublane)
    pb = _round_up(b, tb)
    if pb != b:
        x = jnp.pad(x, ((0, pb - b), (0, 0)))
    num_tiles = pb // tb

    # Weights/biases: index_map -> (0, 0) so they are DMA'd once and stay
    # VMEM-resident across all batch tiles; x/out are pipelined over the grid.
    def fixed(shape):
        return pl.BlockSpec(shape, lambda i: (0, 0))

    in_specs = [
        pl.BlockSpec((tb, STATE_DIM), lambda i: (i, 0)),   # x
        fixed((STATE_DIM, HIDDEN)),                        # w1
        fixed((1, HIDDEN)),                                # b1
        fixed((HIDDEN, HIDDEN)),                           # w2 (bf16)
        fixed((1, HIDDEN)),                                # b2
        fixed((HIDDEN, HIDDEN)),                           # w3 (bf16)
        fixed((1, HIDDEN)),                                # b3
        fixed((2, HIDDEN)),                                # wh (fused head rows)
        fixed((1, OUT_COLS)),                              # bh (fused head bias)
    ]
    out_spec = pl.BlockSpec((tb, OUT_COLS), lambda i: (i, 0))

    out = pl.pallas_call(
        _policy_kernel,
        grid=(num_tiles,),
        in_specs=in_specs,
        out_specs=out_spec,
        out_shape=jax.ShapeDtypeStruct((pb, OUT_COLS), jnp.float32),
        compiler_params=pltpu.CompilerParams(
            dimension_semantics=("parallel",)),            # v7x dual-TC split
    )(
        x,
        params["w1"], params["b1"],
        params["w2"], params["b2"],
        params["w3"], params["b3"],
        params["wh"], params["bh"],
    )

    mean = out[:b, :ACTION_DIM]
    std = out[:b, ACTION_DIM:OUT_COLS]
    return mean, std


def _xavier_uniform(key, fan_in, fan_out):
    # nn.init.xavier_uniform_: U(-a, a), a = sqrt(6 / (fan_in + fan_out)).
    a = jnp.sqrt(6.0 / (fan_in + fan_out))
    return jax.random.uniform(key, (fan_in, fan_out), jnp.float32, -a, a)


def _linear_bias(key, fan_in, fan_out):
    # PyTorch nn.Linear default bias init: U(-1/sqrt(fan_in), 1/sqrt(fan_in)).
    bound = 1.0 / jnp.sqrt(float(fan_in))
    return jax.random.uniform(key, (1, fan_out), jnp.float32, -bound, bound)


def init_params(key):
    keys = jax.random.split(key, 10)
    wm = _xavier_uniform(keys[6], HIDDEN, ACTION_DIM)   # (HIDDEN, 1)
    ws = _xavier_uniform(keys[8], HIDDEN, ACTION_DIM)   # (HIDDEN, 1)
    bm = _linear_bias(keys[7], HIDDEN, ACTION_DIM)      # (1, 1)
    bs = _linear_bias(keys[9], HIDDEN, ACTION_DIM)      # (1, 1)
    return {
        "w1": _xavier_uniform(keys[0], STATE_DIM, HIDDEN),
        "b1": _linear_bias(keys[1], STATE_DIM, HIDDEN),
        # MXU-layer weights stored in bf16 (f32 accumulation inside the kernel).
        "w2": _xavier_uniform(keys[2], HIDDEN, HIDDEN).astype(jnp.bfloat16),
        "b2": _linear_bias(keys[3], HIDDEN, HIDDEN),
        "w3": _xavier_uniform(keys[4], HIDDEN, HIDDEN).astype(jnp.bfloat16),
        "b3": _linear_bias(keys[5], HIDDEN, HIDDEN),
        # Fused head, built once at init: row 0 = mean weights, row 1 = log_std.
        "wh": jnp.concatenate([wm.T, ws.T], axis=0),        # (2, HIDDEN) f32
        "bh": jnp.concatenate([bm, bs], axis=1),            # (1, 2) f32
    }


def _reference_forward(x, p):
    """Pure-JAX reference with the same bf16-operand / f32-accum matmuls."""
    h = jnp.maximum(x @ p["w1"] + p["b1"], 0.0)
    h = jnp.maximum(jnp.dot(h.astype(jnp.bfloat16), p["w2"],
                            preferred_element_type=jnp.float32) + p["b2"], 0.0)
    h = jnp.maximum(jnp.dot(h.astype(jnp.bfloat16), p["w3"],
                            preferred_element_type=jnp.float32) + p["b3"], 0.0)
    head = h @ p["wh"].T + p["bh"]
    return head[:, :ACTION_DIM], jnp.exp(head[:, ACTION_DIM:])


# TODO(synk): gym env creation / NormalizeObservation wrapper (create_env) is
# environment plumbing, not a tensor op, and is intentionally not translated.

if __name__ == "__main__":
    key = jax.random.PRNGKey(0)
    pkey, xkey = jax.random.split(key)
    params = init_params(pkey)
    x = jax.random.normal(xkey, (BATCH, STATE_DIM), jnp.float32)

    mean, std = policy_forward(x, params)
    jax.block_until_ready((mean, std))

    ref_mean, ref_std = _reference_forward(x, params)
    assert mean.shape == (BATCH, ACTION_DIM) and std.shape == (BATCH, ACTION_DIM)
    assert jnp.allclose(mean, ref_mean, atol=2e-3, rtol=2e-3)
    assert jnp.allclose(std, ref_std, atol=2e-3, rtol=2e-3)
    assert bool(jnp.all(std > 0.0))

    print("KERNEL_OK")
</pallas_src>

<mosaic_0001>
module attributes {stable_mosaic.version = 11 : i64} {
  func.func @_policy_kernel(%arg0: i32, %arg1: memref<8x3xf32, #tpu.memory_space<vmem>>, %arg2: memref<3x128xf32, #tpu.memory_space<vmem>>, %arg3: memref<1x128xf32, #tpu.memory_space<vmem>>, %arg4: memref<128x128xbf16, #tpu.memory_space<vmem>>, %arg5: memref<1x128xf32, #tpu.memory_space<vmem>>, %arg6: memref<128x128xbf16, #tpu.memory_space<vmem>>, %arg7: memref<1x128xf32, #tpu.memory_space<vmem>>, %arg8: memref<2x128xf32, #tpu.memory_space<vmem>>, %arg9: memref<1x2xf32, #tpu.memory_space<vmem>>, %arg10: memref<8x2xf32, #tpu.memory_space<vmem>>) attributes {dimension_semantics = [#tpu.dimension_semantics<parallel>], iteration_bounds = array<i64: 1>, scalar_prefetch = 0 : i64, scratch_operands = 0 : i64, tpu.core_type = #tpu.core_type<tc>, window_params = [{transform_indices = @transform_0, window_bounds = array<i64: 8, 3>}, {pipeline_mode = #tpu.pipeline_mode<synchronous>, transform_indices = @transform_1, window_bounds = array<i64: 3, 128>}, {pipeline_mode = #tpu.pipeline_mode<synchronous>, transform_indices = @transform_2, window_bounds = array<i64: 1, 128>}, {pipeline_mode = #tpu.pipeline_mode<synchronous>, transform_indices = @transform_3, window_bounds = array<i64: 128, 128>}, {pipeline_mode = #tpu.pipeline_mode<synchronous>, transform_indices = @transform_4, window_bounds = array<i64: 1, 128>}, {pipeline_mode = #tpu.pipeline_mode<synchronous>, transform_indices = @transform_5, window_bounds = array<i64: 128, 128>}, {pipeline_mode = #tpu.pipeline_mode<synchronous>, transform_indices = @transform_6, window_bounds = array<i64: 1, 128>}, {pipeline_mode = #tpu.pipeline_mode<synchronous>, transform_indices = @transform_7, window_bounds = array<i64: 2, 128>}, {pipeline_mode = #tpu.pipeline_mode<synchronous>, transform_indices = @transform_8, window_bounds = array<i64: 1, 2>}, {transform_indices = @transform_9, window_bounds = array<i64: 8, 2>}]} {
    %c0 = arith.constant 0 : index
    %c0_0 = arith.constant 0 : index
    %0 = vector.load %arg1[%c0, %c0_0] : memref<8x3xf32, #tpu.memory_space<vmem>>, vector<8x3xf32>
    %c0_1 = arith.constant 0 : index
    %c0_2 = arith.constant 0 : index
    %1 = vector.load %arg2[%c0_1, %c0_2] : memref<3x128xf32, #tpu.memory_space<vmem>>, vector<3x128xf32>
    %c0_3 = arith.constant 0 : index
    %c0_4 = arith.constant 0 : index
    %2 = vector.load %arg3[%c0_3, %c0_4] : memref<1x128xf32, #tpu.memory_space<vmem>>, vector<1x128xf32>
    %3 = vector.extract_strided_slice %0 {offsets = [0, 0], sizes = [8, 1], strides = [1, 1]} : vector<8x3xf32> to vector<8x1xf32>
    %4 = vector.extract_strided_slice %1 {offsets = [0, 0], sizes = [1, 128], strides = [1, 1]} : vector<3x128xf32> to vector<1x128xf32>
    %5 = vector.broadcast %3 : vector<8x1xf32> to vector<8x128xf32>
    %6 = vector.broadcast %4 : vector<1x128xf32> to vector<8x128xf32>
    %7 = arith.mulf %5, %6 : vector<8x128xf32>
    %8 = vector.broadcast %2 : vector<1x128xf32> to vector<8x128xf32>
    %9 = arith.addf %8, %7 : vector<8x128xf32>
    %10 = vector.extract_strided_slice %0 {offsets = [0, 1], sizes = [8, 1], strides = [1, 1]} : vector<8x3xf32> to vector<8x1xf32>
    %11 = vector.extract_strided_slice %1 {offsets = [1, 0], sizes = [1, 128], strides = [1, 1]} : vector<3x128xf32> to vector<1x128xf32>
    %12 = vector.broadcast %10 : vector<8x1xf32> to vector<8x128xf32>
    %13 = vector.broadcast %11 : vector<1x128xf32> to vector<8x128xf32>
    %14 = arith.mulf %12, %13 : vector<8x128xf32>
    %15 = arith.addf %9, %14 : vector<8x128xf32>
    %16 = vector.extract_strided_slice %0 {offsets = [0, 2], sizes = [8, 1], strides = [1, 1]} : vector<8x3xf32> to vector<8x1xf32>
    %17 = vector.extract_strided_slice %1 {offsets = [2, 0], sizes = [1, 128], strides = [1, 1]} : vector<3x128xf32> to vector<1x128xf32>
    %18 = vector.broadcast %16 : vector<8x1xf32> to vector<8x128xf32>
    %19 = vector.broadcast %17 : vector<1x128xf32> to vector<8x128xf32>
    %20 = arith.mulf %18, %19 : vector<8x128xf32>
    %21 = arith.addf %15, %20 : vector<8x128xf32>
    %cst = arith.constant 0.000000e+00 : f32
    %22 = vector.broadcast %cst : f32 to vector<8x128xf32>
    %23 = arith.maximumf %21, %22 : vector<8x128xf32>
    %24 = arith.truncf %23 : vector<8x128xf32> to vector<8x128xbf16>
    %c0_5 = arith.constant 0 : index
    %c0_6 = arith.constant 0 : index
    %25 = vector.load %arg4[%c0_5, %c0_6] : memref<128x128xbf16, #tpu.memory_space<vmem>>, vector<128x128xbf16>
    %cst_7 = arith.constant dense<0.000000e+00> : vector<8x128xf32>
    %26 = tpu.matmul %24, %25, %cst_7 {dimension_numbers = #tpu.dot_dimension_numbers<[1], [0], [0], [1], [0, 0, 1, 1], [], []>} : vector<8x128xbf16>, vector<128x128xbf16>, vector<8x128xf32> -> vector<8x128xf32>
    %c0_8 = arith.constant 0 : index
    %c0_9 = arith.constant 0 : index
    %27 = vector.load %arg5[%c0_8, %c0_9] : memref<1x128xf32, #tpu.memory_space<vmem>>, vector<1x128xf32>
    %28 = vector.broadcast %27 : vector<1x128xf32> to vector<8x128xf32>
    %29 = arith.addf %26, %28 : vector<8x128xf32>
    %cst_10 = arith.constant 0.000000e+00 : f32
    %30 = vector.broadcast %cst_10 : f32 to vector<8x128xf32>
    %31 = arith.maximumf %29, %30 : vector<8x128xf32>
    %32 = arith.truncf %31 : vector<8x128xf32> to vector<8x128xbf16>
    %c0_11 = arith.constant 0 : index
    %c0_12 = arith.constant 0 : index
    %33 = vector.load %arg6[%c0_11, %c0_12] : memref<128x128xbf16, #tpu.memory_space<vmem>>, vector<128x128xbf16>
    %cst_13 = arith.constant dense<0.000000e+00> : vector<8x128xf32>
    %34 = tpu.matmul %32, %33, %cst_13 {dimension_numbers = #tpu.dot_dimension_numbers<[1], [0], [0], [1], [0, 0, 1, 1], [], []>} : vector<8x128xbf16>, vector<128x128xbf16>, vector<8x128xf32> -> vector<8x128xf32>
    %c0_14 = arith.constant 0 : index
    %c0_15 = arith.constant 0 : index
    %35 = vector.load %arg7[%c0_14, %c0_15] : memref<1x128xf32, #tpu.memory_space<vmem>>, vector<1x128xf32>
    %36 = vector.broadcast %35 : vector<1x128xf32> to vector<8x128xf32>
    %37 = arith.addf %34, %36 : vector<8x128xf32>
    %cst_16 = arith.constant 0.000000e+00 : f32
    %38 = vector.broadcast %cst_16 : f32 to vector<8x128xf32>
    %39 = arith.maximumf %37, %38 : vector<8x128xf32>
    %c0_17 = arith.constant 0 : index
    %c0_18 = arith.constant 0 : index
    %40 = vector.load %arg8[%c0_17, %c0_18] : memref<2x128xf32, #tpu.memory_space<vmem>>, vector<2x128xf32>
    %c0_19 = arith.constant 0 : index
    %c0_20 = arith.constant 0 : index
    %41 = vector.load %arg9[%c0_19, %c0_20] : memref<1x2xf32, #tpu.memory_space<vmem>>, vector<1x2xf32>
    %42 = vector.extract_strided_slice %40 {offsets = [0, 0], sizes = [1, 128], strides = [1, 1]} : vector<2x128xf32> to vector<1x128xf32>
    %43 = vector.broadcast %42 : vector<1x128xf32> to vector<8x128xf32>
    %44 = arith.mulf %39, %43 : vector<8x128xf32>
    %cst_21 = arith.constant dense<0.000000e+00> : vector<8xf32>
    %45 = vector.multi_reduction <add>, %44, %cst_21 [1] : vector<8x128xf32> to vector<8xf32>
    %46 = vector.shape_cast %45 : vector<8xf32> to vector<8x1xf32>
    %47 = vector.extract_strided_slice %41 {offsets = [0, 0], sizes = [1, 1], strides = [1, 1]} : vector<1x2xf32> to vector<1x1xf32>
    %48 = vector.broadcast %47 : vector<1x1xf32> to vector<8x1xf32>
    %49 = arith.addf %46, %48 : vector<8x1xf32>
    %50 = vector.extract_strided_slice %40 {offsets = [1, 0], sizes = [1, 128], strides = [1, 1]} : vector<2x128xf32> to vector<1x128xf32>
    %51 = vector.broadcast %50 : vector<1x128xf32> to vector<8x128xf32>
    %52 = arith.mulf %39, %51 : vector<8x128xf32>
    %cst_22 = arith.constant dense<0.000000e+00> : vector<8xf32>
    %53 = vector.multi_reduction <add>, %52, %cst_22 [1] : vector<8x128xf32> to vector<8xf32>
    %54 = vector.shape_cast %53 : vector<8xf32> to vector<8x1xf32>
    %55 = vector.extract_strided_slice %41 {offsets = [0, 1], sizes = [1, 1], strides = [1, 1]} : vector<1x2xf32> to vector<1x1xf32>
    %56 = vector.broadcast %55 : vector<1x1xf32> to vector<8x1xf32>
    %57 = arith.addf %54, %56 : vector<8x1xf32>
    %c0_23 = arith.constant 0 : index
    %c0_24 = arith.constant 0 : index
    %58 = vector.load %arg10[%c0_23, %c0_24] : memref<8x2xf32, #tpu.memory_space<vmem>>, vector<8x1xf32>
    tpu.vector_store %arg10[%c0_23, %c0_24], %49 {strides = array<i32>} : memref<8x2xf32, #tpu.memory_space<vmem>>, vector<8x1xf32>,
    %59 = math.exp %57 : vector<8x1xf32>
    %c0_25 = arith.constant 0 : index
    %c1 = arith.constant 1 : index
    %60 = vector.load %arg10[%c0_25, %c1] : memref<8x2xf32, #tpu.memory_space<vmem>>, vector<8x1xf32>
    tpu.vector_store %arg10[%c0_25, %c1], %59 {strides = array<i32>} : memref<8x2xf32, #tpu.memory_space<vmem>>, vector<8x1xf32>,
    return
  }
  func.func @transform_0(%arg0: i32) -> (i32, i32) {
    %c0_i32 = arith.constant 0 : i32
    %c0_i32_0 = arith.constant 0 : i32
    return %arg0, %c0_i32 : i32, i32
  }
  func.func @transform_1(%arg0: i32) -> (i32, i32) {
    %c0_i32 = arith.constant 0 : i32
    %c0_i32_0 = arith.constant 0 : i32
    %c0_i32_1 = arith.constant 0 : i32
    return %c0_i32, %c0_i32_0 : i32, i32
  }
  func.func @transform_2(%arg0: i32) -> (i32, i32) {
    %c0_i32 = arith.constant 0 : i32
    %c0_i32_0 = arith.constant 0 : i32
    %c0_i32_1 = arith.constant 0 : i32
    return %c0_i32, %c0_i32_0 : i32, i32
  }
  func.func @transform_3(%arg0: i32) -> (i32, i32) {
    %c0_i32 = arith.constant 0 : i32
    %c0_i32_0 = arith.constant 0 : i32
    %c0_i32_1 = arith.constant 0 : i32
    return %c0_i32, %c0_i32_0 : i32, i32
  }
  func.func @transform_4(%arg0: i32) -> (i32, i32) {
    %c0_i32 = arith.constant 0 : i32
    %c0_i32_0 = arith.constant 0 : i32
    %c0_i32_1 = arith.constant 0 : i32
    return %c0_i32, %c0_i32_0 : i32, i32
  }
  func.func @transform_5(%arg0: i32) -> (i32, i32) {
    %c0_i32 = arith.constant 0 : i32
    %c0_i32_0 = arith.constant 0 : i32
    %c0_i32_1 = arith.constant 0 : i32
    return %c0_i32, %c0_i32_0 : i32, i32
  }
  func.func @transform_6(%arg0: i32) -> (i32, i32) {
    %c0_i32 = arith.constant 0 : i32
    %c0_i32_0 = arith.constant 0 : i32
    %c0_i32_1 = arith.constant 0 : i32
    return %c0_i32, %c0_i32_0 : i32, i32
  }
  func.func @transform_7(%arg0: i32) -> (i32, i32) {
    %c0_i32 = arith.constant 0 : i32
    %c0_i32_0 = arith.constant 0 : i32
    %c0_i32_1 = arith.constant 0 : i32
    return %c0_i32, %c0_i32_0 : i32, i32
  }
  func.func @transform_8(%arg0: i32) -> (i32, i32) {
    %c0_i32 = arith.constant 0 : i32
    %c0_i32_0 = arith.constant 0 : i32
    %c0_i32_1 = arith.constant 0 : i32
    return %c0_i32, %c0_i32_0 : i32, i32
  }
  func.func @transform_9(%arg0: i32) -> (i32, i32) {
    %c0_i32 = arith.constant 0 : i32
    %c0_i32_0 = arith.constant 0 : i32
    return %arg0, %c0_i32 : i32, i32
  }
}

</mosaic_0001>

<llo_original>
// kernel: policy_forward.1
$region0: #{policy_forward.1}
  #allocation0 [shape = 'u32[]', space=smem, size = 0x4, offset = 0x4, fixed_abs, tag = 'smem constant byte address 0x4 - core index']
  #allocation1 [shape = 'u32[144,128]{1,0:T(1,128)}', space=vmem, size = 0x12000, scoped, tag = 'internal scratch']
  %s0 = inlined_call_operand.vmem [shape: f32[8,3], index: 0, kind: input, shape index: {}]
  %s1 = inlined_call_operand.vmem [shape: f32[3,128], index: 1, kind: input, shape index: {}]
  %s2 = inlined_call_operand.vmem [shape: f32[1,128], index: 2, kind: input, shape index: {}]
  %s3 = inlined_call_operand.hbm [shape: bf16[128,128], index: 3, kind: input, shape index: {}]
  %s4 = inlined_call_operand.vmem [shape: f32[1,128], index: 4, kind: input, shape index: {}]
  %s5 = inlined_call_operand.hbm [shape: bf16[128,128], index: 5, kind: input, shape index: {}]
  %s6 = inlined_call_operand.vmem [shape: f32[1,128], index: 6, kind: input, shape index: {}]
  %s7 = inlined_call_operand.vmem [shape: f32[2,128], index: 7, kind: input, shape index: {}]
  %s8 = inlined_call_operand.vmem [shape: f32[1,2], index: 8, kind: input, shape index: {}]
  %s9 = inlined_call_operand.vmem [shape: f32[8,2], index: 9, kind: output, shape index: {}]
  %s10 = sld [smem:[#allocation0]]
  $region54: #{policy_forward.1} parent=0
    _
  %s12 = ssub.s32 1, %s10
  %s13 = scalar_select 0, %s12, %s10
  $region1: #{policy_forward.1} parent=0
    #allocation2 [shape = 'u8[32768]{0}', space=vmem, size = 0x8000, scoped, tag = 'input window, operand 3, single buffered']
    #allocation3 [shape = 's32[1]{0}', space=sflag, size = 0x4, scoped, tag = 'scoped memory for policy_forward.1']
    #allocation4 [shape = 'u8[32768]{0}', space=vmem, size = 0x8000, scoped, tag = 'input window, operand 5, single buffered']
    #allocation5 [shape = 's32[1]{0}', space=sflag, size = 0x4, scoped, tag = 'scoped memory for policy_forward.1']
    %14 = vsyncpa [#allocation3], 0
    %15 = vsyncpa [#allocation5], 0
    // Predicated region
    $region2: #{policy_forward.1} parent=1 // pred_check
      _
    $region3: #{policy_forward.1} parent=1 // pred_check_branch
      %17 = sbr.rel (0) target = $region5
    $region4: #{policy_forward.1} parent=1 // pred_region
      _
    $region5: #{policy_forward.1} parent=1 // pred_fallthru
      _
    // Predicated region
    $region6: #{policy_forward.1} parent=1 // pred_check
      _
    $region7: #{policy_forward.1} parent=1 // pred_check_branch
      %19 = sbr.rel (0) target = $region9
    $region8: #{policy_forward.1} parent=1 // pred_region
      _
    $region9: #{policy_forward.1} parent=1 // pred_fallthru
      _
    // Predicated region
    $region10: #{policy_forward.1} parent=1 // pred_check
      _
    $region11: #{policy_forward.1} parent=1 // pred_check_branch
      %21 = sbr.rel (0) target = $region13
    $region12: #{policy_forward.1} parent=1 // pred_region
      _
    $region13: #{policy_forward.1} parent=1 // pred_fallthru
      _
    // Predicated region
    $region14: #{policy_forward.1} parent=1 // pred_check
      _
    $region15: #{policy_forward.1} parent=1 // pred_check_branch
      %23 = sbr.rel (0) target = $region17
    $region16: #{policy_forward.1} parent=1 // pred_region
      %s25 = ssub.s32 1024, 1024
      %26 = vsyncadd [#allocation3], %s25
      %s27 = sshll.u32 [#allocation2], 4
      %s28 = int_to_ptr.vmem [resolvable:$true] %s27
      %33 = dma.hbm_to_vmem [thread:$0]  %s3, 1024, %s28, [#allocation3], 64, 64, 4
    $region17: #{policy_forward.1} parent=1 // pred_fallthru
      _
    // Predicated region
    $region18: #{policy_forward.1} parent=1 // pred_check
      _
    $region19: #{policy_forward.1} parent=1 // pred_check_branch
      %35 = sbr.rel (0) target = $region21
    $region20: #{policy_forward.1} parent=1 // pred_region
      _
    $region21: #{policy_forward.1} parent=1 // pred_fallthru
      _
    // Predicated region
    $region22: #{policy_forward.1} parent=1 // pred_check
      _
    $region23: #{policy_forward.1} parent=1 // pred_check_branch
      %37 = sbr.rel (0) target = $region25
    $region24: #{policy_forward.1} parent=1 // pred_region
      %s39 = ssub.s32 1024, 1024
      %40 = vsyncadd [#allocation5], %s39
      %s41 = sshll.u32 [#allocation4], 4
      %s42 = int_to_ptr.vmem [resolvable:$true] %s41
      %47 = dma.hbm_to_vmem [thread:$0]  %s5, 1024, %s42, [#allocation5], 64, 64, 4
    $region25: #{policy_forward.1} parent=1 // pred_fallthru
      _
    // Predicated region
    $region26: #{policy_forward.1} parent=1 // pred_check
      _
    $region27: #{policy_forward.1} parent=1 // pred_check_branch
      %49 = sbr.rel (0) target = $region29
    $region28: #{policy_forward.1} parent=1 // pred_region
      _
    $region29: #{policy_forward.1} parent=1 // pred_fallthru
      _
    // Predicated region
    $region30: #{policy_forward.1} parent=1 // pred_check
      _
    $region31: #{policy_forward.1} parent=1 // pred_check_branch
      %51 = sbr.rel (0) target = $region33
    $region32: #{policy_forward.1} parent=1 // pred_region
      _
    $region33: #{policy_forward.1} parent=1 // pred_fallthru
      _
    // Predicated region
    $region34: #{policy_forward.1} parent=1 // pred_check
      _
    $region35: #{policy_forward.1} parent=1 // pred_check_branch
      %53 = sbr.rel (0) target = $region37
    $region36: #{policy_forward.1} parent=1 // pred_region
      _
    $region37: #{policy_forward.1} parent=1 // pred_fallthru
      _
    // Predicated region
    $region38: #{policy_forward.1} parent=1 // pred_check
      _
    $region39: #{policy_forward.1} parent=1 // pred_check_branch
      %55 = sbr.rel (0) target = $region41
    $region40: #{policy_forward.1} parent=1 // pred_region
      %56 = dma.done [#allocation3], 1024
    $region41: #{policy_forward.1} parent=1 // pred_fallthru
      _
    // Predicated region
    $region42: #{policy_forward.1} parent=1 // pred_check
      _
    $region43: #{policy_forward.1} parent=1 // pred_check_branch
      %58 = sbr.rel (0) target = $region45
    $region44: #{policy_forward.1} parent=1 // pred_region
      %59 = dma.done [#allocation5], 1024
    $region45: #{policy_forward.1} parent=1 // pred_fallthru
      _
    %v61 = vld [vmem:[%s0] sm:$0xff]
    %v62 = vld [vmem:[%s1] sm:$0x7]
    %v63 = vld [vmem:[%s2] sm:$0x1]
    %65 = vset.pattern.permute.xlu0 0
    %66 = vperm.xlu0 %65, %v61
    %v67 = vpop.permute.xlu0 %66
    %v69 = vlaneseq
    %v70 = vshrl.u32 %v69, 7
    %v71 = vsub.s32 0, %v70
    %v72 = vrot.slane %v62, %v71
    %v73 = vmul.f32 %v67, %v72
    %v75 = vlaneseq
    %v76 = vshrl.u32 %v75, 7
    %v77 = vsub.s32 0, %v76
    %v78 = vrot.slane %v63, %v77
    %v80 = vadd.f32 %v78, %v73
    %81 = vset.pattern.permute.xlu0 1
    %82 = vperm.xlu0 %81, %v61
    %v83 = vpop.permute.xlu0 %82
    %v85 = vlaneseq
    %v86 = vshrl.u32 %v85, 7
    %v87 = vsub.s32 1, %v86
    %v88 = vrot.slane %v62, %v87
    %v89 = vmul.f32 %v83, %v88
    %v90 = vadd.f32 %v80, %v89
    %91 = vset.pattern.permute.xlu0 2
    %92 = vperm.xlu0 %91, %v61
    %v93 = vpop.permute.xlu0 %92
    %v95 = vlaneseq
    %v96 = vshrl.u32 %v95, 7
    %v97 = vsub.s32 2, %v96
    %v98 = vrot.slane %v62, %v97
    %v99 = vmul.f32 %v93, %v98
    %v100 = vadd.f32 %v90, %v99
    %v101 = vmax.f32 %v100, 0.0
    %v102 = vpack.c.bf16 %v101, %v101
    %v103 = vld [vmem:[#allocation2] sm:$0xf]
    %v104 = vld [vmem:[#allocation2 + $0x4] sm:$0xf]
    %v105 = vld [vmem:[#allocation2 + $0x8] sm:$0xf]
    %v106 = vld [vmem:[#allocation2 + $0xc] sm:$0xf]
    %v107 = vld [vmem:[#allocation2 + $0x10] sm:$0xf]
    %v108 = vld [vmem:[#allocation2 + $0x14] sm:$0xf]
    %v109 = vld [vmem:[#allocation2 + $0x18] sm:$0xf]
    %v110 = vld [vmem:[#allocation2 + $0x1c] sm:$0xf]
    %v111 = vld [vmem:[#allocation2 + $0x20] sm:$0xf]
    %v112 = vld [vmem:[#allocation2 + $0x24] sm:$0xf]
    %v113 = vld [vmem:[#allocation2 + $0x28] sm:$0xf]
    %v114 = vld [vmem:[#allocation2 + $0x2c] sm:$0xf]
    %v115 = vld [vmem:[#allocation2 + $0x30] sm:$0xf]
    %v116 = vld [vmem:[#allocation2 + $0x34] sm:$0xf]
    %v117 = vld [vmem:[#allocation2 + $0x38] sm:$0xf]
    %v118 = vld [vmem:[#allocation2 + $0x3c] sm:$0xf]
    %v119 = vld [vmem:[%s4] sm:$0x1]
    %v121 = vlaneseq
    %v122 = vshrl.u32 %v121, 7
    %v123 = vsub.s32 0, %v122
    %v124 = vrot.slane %v119, %v123
    %v142 = vunpack.c.l.b16 %v103
    %v143 = vunpack.c.l.b16 %v104
    %v144 = vunpack.c.l.b16 %v105
    %v145 = vunpack.c.l.b16 %v106
    %v146 = vunpack.c.l.b16 %v107
    %v147 = vunpack.c.l.b16 %v108
    %v148 = vunpack.c.l.b16 %v109
    %v149 = vunpack.c.l.b16 %v110
    %v150 = vunpack.c.l.b16 %v111
    %v151 = vunpack.c.l.b16 %v112
    %v152 = vunpack.c.l.b16 %v113
    %v153 = vunpack.c.l.b16 %v114
    %v154 = vunpack.c.l.b16 %v115
    %v155 = vunpack.c.l.b16 %v116
    %v156 = vunpack.c.l.b16 %v117
    %v157 = vunpack.c.l.b16 %v118
    %v158 = vpack.c.b16 %v143, %v142
    %v159 = vpack.c.b16 %v145, %v144
    %v160 = vpack.c.b16 %v147, %v146
    %v161 = vpack.c.b16 %v149, %v148
    %v162 = vpack.c.b16 %v151, %v150
    %v163 = vpack.c.b16 %v153, %v152
    %v164 = vpack.c.b16 %v155, %v154
    %v165 = vpack.c.b16 %v157, %v156
    %174 = vmatprep.subr.bf16.mxu0 0
    %175 = vmatpush1.bf16.msra.mxu0 %v165
    %176 = vmatprep.subr.bf16.mxu0 0
    %177 = vmatpush1.bf16.msra.mxu0 %v164
    %178 = vmatprep.subr.bf16.mxu0 0
    %179 = vmatpush1.bf16.msra.mxu0 %v163
    %180 = vmatprep.subr.bf16.mxu0 0
    %181 = vmatpush1.bf16.msra.mxu0 %v162
    %182 = vmatprep.subr.bf16.mxu0 0
    %183 = vmatpush1.bf16.msra.mxu0 %v161
    %184 = vmatprep.subr.bf16.mxu0 0
    %185 = vmatpush1.bf16.msra.mxu0 %v160
    %186 = vmatprep.subr.bf16.mxu0 0
    %187 = vmatpush1.bf16.msra.mxu0 %v159
    %188 = vmatprep.subr.bf16.mxu0 0
    %189 = vmatpush1.bf16.msra.mxu0 %v158
    %190 = vmatprep.subr.bf16.mxu0 0
    %191 = vmatpush2.bf16.msra.mxu0 0
    %192 = vmatprep.subr.bf16.mxu0 0
    %193 = vmatpush2.bf16.msra.mxu0 0
    %194 = vmatprep.subr.bf16.mxu0 0
    %195 = vmatpush2.bf16.msra.mxu0 0
    %196 = vmatprep.subr.bf16.mxu0 0
    %197 = vmatpush2.bf16.msra.mxu0 0
    %198 = vmatprep.subr.bf16.mxu0 0
    %199 = vmatpush2.bf16.msra.mxu0 0
    %200 = vmatprep.subr.bf16.mxu0 0
    %201 = vmatpush2.bf16.msra.mxu0 0
    %202 = vmatprep.subr.bf16.mxu0 0
    %203 = vmatpush2.bf16.msra.mxu0 0
    %204 = vmatprep.subr.bf16.mxu0 0
    %205 = vmatpush2.bf16.msra.mxu0 0
    %206 = vmatprep.mubr.bf16.mxu0 0
    %207 = vmatmul.mubr.bf16.gmra.mxu0 %v102
    %v208 = vpop.f32.mrf.mxu0
    %v209 = vadd.f32 %v124, %v208
    %v210 = vpop.f32.mrf.mxu0
    %v211 = vpop.f32.mrf.mxu0
    %v212 = vpop.f32.mrf.mxu0
    %213 = vdwg.mxu0
    %v214 = vmax.f32 %v209, 0.0
    %v215 = vpack.c.bf16 %v214, %v214
    %v216 = vld [vmem:[#allocation4] sm:$0xf]
    %v217 = vld [vmem:[#allocation4 + $0x4] sm:$0xf]
    %v218 = vld [vmem:[#allocation4 + $0x8] sm:$0xf]
    %v219 = vld [vmem:[#allocation4 + $0xc] sm:$0xf]
    %v220 = vld [vmem:[#allocation4 + $0x10] sm:$0xf]
    %v221 = vld [vmem:[#allocation4 + $0x14] sm:$0xf]
    %v222 = vld [vmem:[#allocation4 + $0x18] sm:$0xf]
    %v223 = vld [vmem:[#allocation4 + $0x1c] sm:$0xf]
    %v224 = vld [vmem:[#allocation4 + $0x20] sm:$0xf]
    %v225 = vld [vmem:[#allocation4 + $0x24] sm:$0xf]
    %v226 = vld [vmem:[#allocation4 + $0x28] sm:$0xf]
    %v227 = vld [vmem:[#allocation4 + $0x2c] sm:$0xf]
    %v228 = vld [vmem:[#allocation4 + $0x30] sm:$0xf]
    %v229 = vld [vmem:[#allocation4 + $0x34] sm:$0xf]
    %v230 = vld [vmem:[#allocation4 + $0x38] sm:$0xf]
    %v231 = vld [vmem:[#allocation4 + $0x3c] sm:$0xf]
    %v232 = vld [vmem:[%s6] sm:$0x1]
    %v234 = vlaneseq
    %v235 = vshrl.u32 %v234, 7
    %v236 = vsub.s32 0, %v235
    %v237 = vrot.slane %v232, %v236
    %v255 = vunpack.c.l.b16 %v216
    %v256 = vunpack.c.l.b16 %v217
    %v257 = vunpack.c.l.b16 %v218
    %v258 = vunpack.c.l.b16 %v219
    %v259 = vunpack.c.l.b16 %v220
    %v260 = vunpack.c.l.b16 %v221
    %v261 = vunpack.c.l.b16 %v222
    %v262 = vunpack.c.l.b16 %v223
    %v263 = vunpack.c.l.b16 %v224
    %v264 = vunpack.c.l.b16 %v225
    %v265 = vunpack.c.l.b16 %v226
    %v266 = vunpack.c.l.b16 %v227
    %v267 = vunpack.c.l.b16 %v228
    %v268 = vunpack.c.l.b16 %v229
    %v269 = vunpack.c.l.b16 %v230
    %v270 = vunpack.c.l.b16 %v231
    %v271 = vpack.c.b16 %v256, %v255
    %v272 = vpack.c.b16 %v258, %v257
    %v273 = vpack.c.b16 %v260, %v259
    %v274 = vpack.c.b16 %v262, %v261
    %v275 = vpack.c.b16 %v264, %v263
    %v276 = vpack.c.b16 %v266, %v265
    %v277 = vpack.c.b16 %v268, %v267
    %v278 = vpack.c.b16 %v270, %v269
    %287 = vmatprep.subr.bf16.mxu0 0
    %288 = vmatpush1.bf16.msra.mxu0 %v278
    %289 = vmatprep.subr.bf16.mxu0 0
    %290 = vmatpush1.bf16.msra.mxu0 %v277
    %291 = vmatprep.subr.bf16.mxu0 0
    %292 = vmatpush1.bf16.msra.mxu0 %v276
    %293 = vmatprep.subr.bf16.mxu0 0
    %294 = vmatpush1.bf16.msra.mxu0 %v275
    %295 = vmatprep.subr.bf16.mxu0 0
    %296 = vmatpush1.bf16.msra.mxu0 %v274
    %297 = vmatprep.subr.bf16.mxu0 0
    %298 = vmatpush1.bf16.msra.mxu0 %v273
    %299 = vmatprep.subr.bf16.mxu0 0
    %300 = vmatpush1.bf16.msra.mxu0 %v272
    %301 = vmatprep.subr.bf16.mxu0 0
    %302 = vmatpush1.bf16.msra.mxu0 %v271
    %303 = vmatprep.subr.bf16.mxu0 0
    %304 = vmatpush2.bf16.msra.mxu0 0
    %305 = vmatprep.subr.bf16.mxu0 0
    %306 = vmatpush2.bf16.msra.mxu0 0
    %307 = vmatprep.subr.bf16.mxu0 0
    %308 = vmatpush2.bf16.msra.mxu0 0
    %309 = vmatprep.subr.bf16.mxu0 0
    %310 = vmatpush2.bf16.msra.mxu0 0
    %311 = vmatprep.subr.bf16.mxu0 0
    %312 = vmatpush2.bf16.msra.mxu0 0
    %313 = vmatprep.subr.bf16.mxu0 0
    %314 = vmatpush2.bf16.msra.mxu0 0
    %315 = vmatprep.subr.bf16.mxu0 0
    %316 = vmatpush2.bf16.msra.mxu0 0
    %317 = vmatprep.subr.bf16.mxu0 0
    %318 = vmatpush2.bf16.msra.mxu0 0
    %319 = vmatprep.mubr.bf16.mxu0 0
    %320 = vmatmul.mubr.bf16.gmra.mxu0 %v215
    %v321 = vpop.f32.mrf.mxu0
    %v322 = vadd.f32 %v237, %v321
    %v323 = vpop.f32.mrf.mxu0
    %v324 = vpop.f32.mrf.mxu0
    %v325 = vpop.f32.mrf.mxu0
    %326 = vdwg.mxu0
    %v327 = vmax.f32 %v322, 0.0
    %v328 = vld [vmem:[%s7] sm:$0x3]
    %v329 = vld [vmem:[%s8] sm:$0x1]
    %v330 = vlaneseq
    %v331 = vshrl.u32 %v330, 7
    %v332 = vsub.s32 0, %v331
    %v333 = vrot.slane %v328, %v332
    %v334 = vmul.f32 %v327, %v333
    %335 = vadd.xlane.f32.xlu0 %v334
    %v336 = vpop.xlane.xlu0 %335
    %v338 = vlaneseq
    %v339 = vshrl.u32 %v338, 7
    %v340 = vsub.s32 0, %v339
    %v341 = vrot.slane %v329, %v340
    %v343 = vadd.f32 %v336, %v341
    %v344 = vlaneseq
    %v345 = vshrl.u32 %v344, 7
    %v346 = vsub.s32 1, %v345
    %v347 = vrot.slane %v328, %v346
    %v348 = vmul.f32 %v327, %v347
    %349 = vadd.xlane.f32.xlu0 %v348
    %v350 = vpop.xlane.xlu0 %349
    %v351 = vadd.f32 %v350, %v341
    %vm352 = vcmask 7168
    %353 = vst.msk [vmem:[%s9] sm:$0xff] %vm352, %v343
    %v354 = vmul.f32 %v351, 1.442695
    %v355 = vpow.pop %v354
    %vm356 = vcmask 15368
    %357 = vst.msk [vmem:[%s9] sm:$0xff] %vm356, %v355
    // Predicated region
    $region46: #{policy_forward.1} parent=1 // pred_check
      _
    $region47: #{policy_forward.1} parent=1 // pred_check_branch
      %359 = sbr.rel (0) target = $region49
    $region48: #{policy_forward.1} parent=1 // pred_region
      _
    $region49: #{policy_forward.1} parent=1 // pred_fallthru
      _
    // Predicated region
    $region50: #{policy_forward.1} parent=1 // pred_check
      _
    $region51: #{policy_forward.1} parent=1 // pred_check_branch
      %361 = sbr.rel (0) target = $region53
    $region52: #{policy_forward.1} parent=1 // pred_region
      _
    $region53: #{policy_forward.1} parent=1 // pred_fallthru
      _
    %362 = vsyncpa [#allocation3], 1
    %363 = vsyncpa [#allocation5], 1

</llo_original>
